<compile_context>
chip_gen: v5e
topology: v5e:2x2
jax: 0.10.0
libtpu: 0.0.40
codegen_flags: <defaults>
</compile_context>

<pallas_src>
import math
from functools import partial

import jax
import jax.numpy as jnp
from jax.experimental import pallas as pl
from jax.experimental.pallas import tpu as pltpu


def _round_up(x, m):
    return (x + m - 1) // m * m


# ----------------------------- kernel -----------------------------

def vae_fused_kernel(
    x_ref, eps_ref,
    ew1_ref, eb1_ref, ew2_ref, eb2_ref, ehw_ref, ehb_ref,
    dw1_ref, db1_ref, dw2_ref, db2_ref, dhw_ref, dhb_ref,
    out_ref,
    *, lat,
):
    """One batch tile of the full VAE forward.

    Packed output slab layout (one lane-dense write, width = round_up(2*lat+2*out,128)):
        [ mu(0:lat) | log_var(lat:2lat) | x_hat(2lat:2lat+out) | x_hat_var(..) | 0 pad ]
    The head weights are pre-placed into those column ranges, so the two fused head
    matmuls produce the packed slab directly (no in-kernel concat/copies).
    """
    f32 = jnp.float32
    x = x_ref[...].astype(f32)

    # ---- encoder trunk ----
    h = jnp.dot(x, ew1_ref[...], preferred_element_type=f32) + eb1_ref[...]
    h = jnp.maximum(h, 0.0)
    h = jnp.dot(h, ew2_ref[...], preferred_element_type=f32) + eb2_ref[...]
    h = jnp.maximum(h, 0.0)

    # ---- fused encoder heads -> [mu | log_var | 0...] slab ----
    enc = jnp.dot(h, ehw_ref[...], preferred_element_type=f32) + ehb_ref[...]
    mu = enc[:, :lat]
    log_var = enc[:, lat:2 * lat]

    # ---- reparameterize: z = eps * exp(0.5 * log_var) + mu ----
    eps = eps_ref[...].astype(f32)
    z = eps * jnp.exp(0.5 * log_var) + mu

    # ---- decoder trunk ----
    d = jnp.dot(z, dw1_ref[...], preferred_element_type=f32) + db1_ref[...]
    d = jnp.maximum(d, 0.0)
    d = jnp.dot(d, dw2_ref[...], preferred_element_type=f32) + db2_ref[...]
    d = jnp.maximum(d, 0.0)

    # ---- fused decoder heads -> [0 | 0 | x_hat | x_hat_var | 0...] slab ----
    dec = jnp.dot(d, dhw_ref[...], preferred_element_type=f32) + dhb_ref[...]

    # column ranges are disjoint -> sum == packed [mu|log_var|x_hat|x_hat_var]
    out_ref[...] = (enc + dec).astype(out_ref.dtype)


# --------------------------- parameters ---------------------------

def _linear_params(key, fan_in, fan_out):
    """PyTorch nn.Linear default init: U(-1/sqrt(fan_in), 1/sqrt(fan_in))."""
    kw, kb = jax.random.split(key)
    bound = 1.0 / math.sqrt(fan_in)
    # stored transposed: (in, out)
    w = jax.random.uniform(kw, (fan_in, fan_out), jnp.float32, -bound, bound)
    b = jax.random.uniform(kb, (1, fan_out), jnp.float32, -bound, bound)
    return w, b


def init_vae_params(key, input_dims, latent_dims, hidden_sizes=(256, 128),
                    output_dims=None):
    output_dims = input_dims if output_dims is None else output_dims
    h0, h1 = hidden_sizes
    keys = jax.random.split(key, 8)
    params = {}
    # encoder: in->h0, h0->h1, h1->lat (mu), h1->lat (log_var)
    params["ew1"], params["eb1"] = _linear_params(keys[0], input_dims, h0)
    params["ew2"], params["eb2"] = _linear_params(keys[1], h0, h1)
    params["ewmu"], params["ebmu"] = _linear_params(keys[2], h1, latent_dims)
    params["ewlv"], params["eblv"] = _linear_params(keys[3], h1, latent_dims)
    # decoder: lat->h1, h1->h0, h0->out (mu), h0->out (var)
    params["dw1"], params["db1"] = _linear_params(keys[4], latent_dims, h1)
    params["dw2"], params["db2"] = _linear_params(keys[5], h1, h0)
    params["dwmu"], params["dbmu"] = _linear_params(keys[6], h0, output_dims)
    params["dwlv"], params["dblv"] = _linear_params(keys[7], h0, output_dims)
    return params


def pack_vae_params(params, input_dims, latent_dims, hidden_sizes=(256, 128),
                    output_dims=None):
    """Pad hidden/output feature columns to 128 multiples, keep real K rows for the
    first encoder/decoder layers, and pre-place the head weights into the packed
    output-slab column ranges (so the kernel's head matmuls emit the slab directly)."""
    output_dims = input_dims if output_dims is None else output_dims
    h0, h1 = hidden_sizes
    lat, out = latent_dims, output_dims
    h0_p = _round_up(h0, 128)
    h1_p = _round_up(h1, 128)
    S = _round_up(2 * lat + 2 * out, 128)           # packed output slab width

    f32 = jnp.float32

    def pad_cols(a, cols):
        return jnp.pad(a, ((0, 0), (0, cols - a.shape[1])))

    def pad2(a, rows, cols):
        return jnp.pad(a, ((0, rows - a.shape[0]), (0, cols - a.shape[1])))

    # fused encoder heads placed at slab columns [0:lat] and [lat:2lat]
    ehw = jnp.zeros((h1_p, S), f32)
    ehw = ehw.at[:h1, 0:lat].set(params["ewmu"])
    ehw = ehw.at[:h1, lat:2 * lat].set(params["ewlv"])
    ehb = jnp.zeros((1, S), f32)
    ehb = ehb.at[:, 0:lat].set(params["ebmu"])
    ehb = ehb.at[:, lat:2 * lat].set(params["eblv"])

    # fused decoder heads placed at slab columns [2lat:2lat+out] and [2lat+out:2lat+2out]
    dhw = jnp.zeros((h0_p, S), f32)
    dhw = dhw.at[:h0, 2 * lat:2 * lat + out].set(params["dwmu"])
    dhw = dhw.at[:h0, 2 * lat + out:2 * lat + 2 * out].set(params["dwlv"])
    dhb = jnp.zeros((1, S), f32)
    dhb = dhb.at[:, 2 * lat:2 * lat + out].set(params["dbmu"])
    dhb = dhb.at[:, 2 * lat + out:2 * lat + 2 * out].set(params["dblv"])

    packed = {
        "ew1": pad_cols(params["ew1"], h0_p),          # (in,  h0_p)  real K rows
        "eb1": pad_cols(params["eb1"], h0_p),
        "ew2": pad2(params["ew2"], h0_p, h1_p),        # (h0_p, h1_p)
        "eb2": pad_cols(params["eb2"], h1_p),
        "ehw": ehw, "ehb": ehb,                        # (h1_p, S)
        "dw1": pad_cols(params["dw1"], h1_p),          # (lat, h1_p)  real K rows
        "db1": pad_cols(params["db1"], h1_p),
        "dw2": pad2(params["dw2"], h1_p, h0_p),        # (h1_p, h0_p)
        "db2": pad_cols(params["db2"], h0_p),
        "dhw": dhw, "dhb": dhb,                        # (h0_p, S)
    }
    dims = {"input_dims": input_dims, "latent_dims": latent_dims,
            "output_dims": output_dims, "h0_p": h0_p, "h1_p": h1_p, "S": S}
    return packed, dims


# ----------------------------- wrapper -----------------------------

def vae_forward(x, eps, packed, dims, *, batch_tile=2048):
    """Full VAE forward; batch-tiled grid, weights VMEM-resident, packed output slab.

    x:   (B, input_dims)  f32 or bf16
    eps: (B, latent_dims) f32 or bf16   (epsilon ~ N(0,1), drawn by the caller)
    Outputs match x.dtype.
    """
    B, in_dim = x.shape
    lat = dims["latent_dims"]
    out_dim = dims["output_dims"]
    S = dims["S"]
    out_dtype = x.dtype

    # ---- batch tile selection ----
    # big tiles amortize the ~0.35us per-step overhead; keep >=2 grid steps when the
    # batch allows it so the "parallel" axis can shard across v7x's two TensorCores.
    itemsize = min(jnp.dtype(x.dtype).itemsize, jnp.dtype(eps.dtype).itemsize)
    granule = 8 if itemsize >= 4 else 16            # sublane packing (f32 vs bf16)
    TB = min(batch_tile, _round_up(pl.cdiv(B, 2), granule))
    TB = max(granule, (TB // granule) * granule)
    Bp = _round_up(B, TB)
    num_tiles = Bp // TB

    # only the batch dim is (conditionally) padded; feature dims stream unpadded
    if Bp != B:
        x = jnp.pad(x, ((0, Bp - B), (0, 0)))
        eps = jnp.pad(eps, ((0, Bp - B), (0, 0)))

    weights = (
        packed["ew1"], packed["eb1"], packed["ew2"], packed["eb2"],
        packed["ehw"], packed["ehb"],
        packed["dw1"], packed["db1"], packed["dw2"], packed["db2"],
        packed["dhw"], packed["dhb"],
    )

    in_specs = [
        pl.BlockSpec((TB, in_dim), lambda i: (i, 0)),     # x: unpadded feature width
        pl.BlockSpec((TB, lat), lambda i: (i, 0)),        # eps: unpadded feature width
        # NOTE: if DMA is still exposed, pipeline_mode=pl.Buffered(3) on the two specs
        # above (and the out spec) is a cheap extra ~5-10%.
    ] + [pl.BlockSpec(w.shape, lambda i: (0, 0)) for w in weights]   # VMEM-resident

    # advisory cost estimate: lets XLA overlap surrounding ops with the kernel
    h0_p, h1_p = dims["h0_p"], dims["h1_p"]
    flops = 2 * Bp * (in_dim * h0_p + h0_p * h1_p + h1_p * S
                      + lat * h1_p + h1_p * h0_p + h0_p * S)
    bytes_accessed = (
        int(x.size) * jnp.dtype(x.dtype).itemsize
        + int(eps.size) * jnp.dtype(eps.dtype).itemsize
        + sum(int(w.size) * jnp.dtype(w.dtype).itemsize for w in weights)
        + Bp * S * jnp.dtype(out_dtype).itemsize
    )
    cost = pl.CostEstimate(flops=flops, transcendentals=Bp * lat,
                           bytes_accessed=bytes_accessed)

    slab = pl.pallas_call(
        partial(vae_fused_kernel, lat=lat),
        grid=(num_tiles,),
        in_specs=in_specs,
        out_specs=pl.BlockSpec((TB, S), lambda i: (i, 0)),
        out_shape=jax.ShapeDtypeStruct((Bp, S), out_dtype),
        compiler_params=pltpu.CompilerParams(
            # batch grid shards across the two TensorCores on v7x; harmless on v5e/v6e
            dimension_semantics=("parallel",),
            # explicit scoped VMEM: fits TB=2048 comfortably, stays < v7x 64 MiB physical
            vmem_limit_bytes=48 * 1024 * 1024,
        ),
        cost_estimate=cost,
    )(x, eps, *weights)

    # slice the four results out of the single packed slab (small, lane-dense reads)
    mu = slab[:B, 0:lat]
    log_var = slab[:B, lat:2 * lat]
    x_hat = slab[:B, 2 * lat:2 * lat + out_dim]
    x_hat_var = slab[:B, 2 * lat + out_dim:2 * lat + 2 * out_dim]
    return x_hat, x_hat_var, mu, log_var


# --------------------------- reference ----------------------------

def vae_forward_ref(x, eps, params):
    """Pure-JAX reference (unpadded, unfused) for correctness checking."""
    h = jnp.maximum(x @ params["ew1"] + params["eb1"], 0.0)
    h = jnp.maximum(h @ params["ew2"] + params["eb2"], 0.0)
    mu = h @ params["ewmu"] + params["ebmu"]
    log_var = h @ params["ewlv"] + params["eblv"]
    z = eps * jnp.exp(0.5 * log_var) + mu
    d = jnp.maximum(z @ params["dw1"] + params["db1"], 0.0)
    d = jnp.maximum(d @ params["dw2"] + params["db2"], 0.0)
    x_hat = d @ params["dwmu"] + params["dbmu"]
    x_hat_var = d @ params["dwlv"] + params["dblv"]
    return x_hat, x_hat_var, mu, log_var


if __name__ == "__main__":
    # Small, module-consistent shapes (hidden_sizes are the module defaults).
    batch = 64
    input_dims = 16
    latent_dims = 8
    hidden_sizes = (256, 128)

    key = jax.random.PRNGKey(0)
    kx, keps, kparams = jax.random.split(key, 3)

    x = jax.random.normal(kx, (batch, input_dims), jnp.float32)
    # epsilon ~ N(0,1): torch uses .normal_(); here drawn deterministically in-script
    eps = jax.random.normal(keps, (batch, latent_dims), jnp.float32)

    params = init_vae_params(kparams, input_dims, latent_dims, hidden_sizes)
    packed, dims = pack_vae_params(params, input_dims, latent_dims, hidden_sizes)

    ref = vae_forward_ref(x, eps, params)

    # ---- f32 HBM I/O path (exact check) ----
    outs = jax.block_until_ready(vae_forward(x, eps, packed, dims))
    for got, want in zip(outs, ref):
        assert got.shape == want.shape
        assert jnp.allclose(got, want, atol=1e-4, rtol=1e-4), "f32 mismatch vs reference"

    # ---- bf16 HBM I/O path (halves activation DMA; f32 compute inside the kernel) ----
    outs_bf16 = jax.block_until_ready(
        vae_forward(x.astype(jnp.bfloat16), eps.astype(jnp.bfloat16), packed, dims))
    for got, want in zip(outs_bf16, ref):
        assert got.shape == want.shape
        assert jnp.allclose(got.astype(jnp.float32), want, atol=5e-2, rtol=5e-2), \
            "bf16 mismatch vs reference"

    print("KERNEL_OK")
</pallas_src>

<mosaic_0001>
module attributes {stable_mosaic.version = 11 : i64} {
  func.func @vae_fused_kernel(%arg0: i32, %arg1: memref<32x16xf32, #tpu.memory_space<vmem>>, %arg2: memref<32x8xf32, #tpu.memory_space<vmem>>, %arg3: memref<16x256xf32, #tpu.memory_space<vmem>>, %arg4: memref<1x256xf32, #tpu.memory_space<vmem>>, %arg5: memref<256x128xf32, #tpu.memory_space<vmem>>, %arg6: memref<1x128xf32, #tpu.memory_space<vmem>>, %arg7: memref<128x128xf32, #tpu.memory_space<vmem>>, %arg8: memref<1x128xf32, #tpu.memory_space<vmem>>, %arg9: memref<8x128xf32, #tpu.memory_space<vmem>>, %arg10: memref<1x128xf32, #tpu.memory_space<vmem>>, %arg11: memref<128x256xf32, #tpu.memory_space<vmem>>, %arg12: memref<1x256xf32, #tpu.memory_space<vmem>>, %arg13: memref<256x128xf32, #tpu.memory_space<vmem>>, %arg14: memref<1x128xf32, #tpu.memory_space<vmem>>, %arg15: memref<32x128xf32, #tpu.memory_space<vmem>>) attributes {dimension_semantics = [#tpu.dimension_semantics<parallel>], iteration_bounds = array<i64: 2>, scalar_prefetch = 0 : i64, scratch_operands = 0 : i64, tpu.core_type = #tpu.core_type<tc>, window_params = [{transform_indices = @transform_0, window_bounds = array<i64: 32, 16>}, {transform_indices = @transform_1, window_bounds = array<i64: 32, 8>}, {pipeline_mode = #tpu.pipeline_mode<synchronous>, transform_indices = @transform_2, window_bounds = array<i64: 16, 256>}, {pipeline_mode = #tpu.pipeline_mode<synchronous>, transform_indices = @transform_3, window_bounds = array<i64: 1, 256>}, {pipeline_mode = #tpu.pipeline_mode<synchronous>, transform_indices = @transform_4, window_bounds = array<i64: 256, 128>}, {pipeline_mode = #tpu.pipeline_mode<synchronous>, transform_indices = @transform_5, window_bounds = array<i64: 1, 128>}, {pipeline_mode = #tpu.pipeline_mode<synchronous>, transform_indices = @transform_6, window_bounds = array<i64: 128, 128>}, {pipeline_mode = #tpu.pipeline_mode<synchronous>, transform_indices = @transform_7, window_bounds = array<i64: 1, 128>}, {pipeline_mode = #tpu.pipeline_mode<synchronous>, transform_indices = @transform_8, window_bounds = array<i64: 8, 128>}, {pipeline_mode = #tpu.pipeline_mode<synchronous>, transform_indices = @transform_9, window_bounds = array<i64: 1, 128>}, {pipeline_mode = #tpu.pipeline_mode<synchronous>, transform_indices = @transform_10, window_bounds = array<i64: 128, 256>}, {pipeline_mode = #tpu.pipeline_mode<synchronous>, transform_indices = @transform_11, window_bounds = array<i64: 1, 256>}, {pipeline_mode = #tpu.pipeline_mode<synchronous>, transform_indices = @transform_12, window_bounds = array<i64: 256, 128>}, {pipeline_mode = #tpu.pipeline_mode<synchronous>, transform_indices = @transform_13, window_bounds = array<i64: 1, 128>}, {transform_indices = @transform_14, window_bounds = array<i64: 32, 128>}]} {
    %c0 = arith.constant 0 : index
    %c0_0 = arith.constant 0 : index
    %0 = vector.load %arg1[%c0, %c0_0] : memref<32x16xf32, #tpu.memory_space<vmem>>, vector<32x16xf32>
    %c0_1 = arith.constant 0 : index
    %c0_2 = arith.constant 0 : index
    %1 = vector.load %arg3[%c0_1, %c0_2] : memref<16x256xf32, #tpu.memory_space<vmem>>, vector<16x256xf32>
    %cst = arith.constant dense<0.000000e+00> : vector<32x256xf32>
    %2 = tpu.matmul %0, %1, %cst {dimension_numbers = #tpu.dot_dimension_numbers<[1], [0], [0], [1], [0, 0, 1, 1], [], []>} : vector<32x16xf32>, vector<16x256xf32>, vector<32x256xf32> -> vector<32x256xf32>
    %c0_3 = arith.constant 0 : index
    %c0_4 = arith.constant 0 : index
    %3 = vector.load %arg4[%c0_3, %c0_4] : memref<1x256xf32, #tpu.memory_space<vmem>>, vector<1x256xf32>
    %4 = vector.broadcast %3 : vector<1x256xf32> to vector<32x256xf32>
    %5 = arith.addf %2, %4 : vector<32x256xf32>
    %cst_5 = arith.constant 0.000000e+00 : f32
    %6 = vector.broadcast %cst_5 : f32 to vector<32x256xf32>
    %7 = arith.maximumf %5, %6 : vector<32x256xf32>
    %c0_6 = arith.constant 0 : index
    %c0_7 = arith.constant 0 : index
    %8 = vector.load %arg5[%c0_6, %c0_7] : memref<256x128xf32, #tpu.memory_space<vmem>>, vector<256x128xf32>
    %cst_8 = arith.constant dense<0.000000e+00> : vector<32x128xf32>
    %9 = tpu.matmul %7, %8, %cst_8 {dimension_numbers = #tpu.dot_dimension_numbers<[1], [0], [0], [1], [0, 0, 1, 1], [], []>} : vector<32x256xf32>, vector<256x128xf32>, vector<32x128xf32> -> vector<32x128xf32>
    %c0_9 = arith.constant 0 : index
    %c0_10 = arith.constant 0 : index
    %10 = vector.load %arg6[%c0_9, %c0_10] : memref<1x128xf32, #tpu.memory_space<vmem>>, vector<1x128xf32>
    %11 = vector.broadcast %10 : vector<1x128xf32> to vector<32x128xf32>
    %12 = arith.addf %9, %11 : vector<32x128xf32>
    %cst_11 = arith.constant 0.000000e+00 : f32
    %13 = vector.broadcast %cst_11 : f32 to vector<32x128xf32>
    %14 = arith.maximumf %12, %13 : vector<32x128xf32>
    %c0_12 = arith.constant 0 : index
    %c0_13 = arith.constant 0 : index
    %15 = vector.load %arg7[%c0_12, %c0_13] : memref<128x128xf32, #tpu.memory_space<vmem>>, vector<128x128xf32>
    %cst_14 = arith.constant dense<0.000000e+00> : vector<32x128xf32>
    %16 = tpu.matmul %14, %15, %cst_14 {dimension_numbers = #tpu.dot_dimension_numbers<[1], [0], [0], [1], [0, 0, 1, 1], [], []>} : vector<32x128xf32>, vector<128x128xf32>, vector<32x128xf32> -> vector<32x128xf32>
    %c0_15 = arith.constant 0 : index
    %c0_16 = arith.constant 0 : index
    %17 = vector.load %arg8[%c0_15, %c0_16] : memref<1x128xf32, #tpu.memory_space<vmem>>, vector<1x128xf32>
    %18 = vector.broadcast %17 : vector<1x128xf32> to vector<32x128xf32>
    %19 = arith.addf %16, %18 : vector<32x128xf32>
    %20 = vector.extract_strided_slice %19 {offsets = [0, 0], sizes = [32, 8], strides = [1, 1]} : vector<32x128xf32> to vector<32x8xf32>
    %21 = vector.extract_strided_slice %19 {offsets = [0, 8], sizes = [32, 8], strides = [1, 1]} : vector<32x128xf32> to vector<32x8xf32>
    %c0_17 = arith.constant 0 : index
    %c0_18 = arith.constant 0 : index
    %22 = vector.load %arg2[%c0_17, %c0_18] : memref<32x8xf32, #tpu.memory_space<vmem>>, vector<32x8xf32>
    %cst_19 = arith.constant 5.000000e-01 : f32
    %23 = vector.broadcast %cst_19 : f32 to vector<32x8xf32>
    %24 = arith.mulf %23, %21 : vector<32x8xf32>
    %25 = math.exp %24 : vector<32x8xf32>
    %26 = arith.mulf %22, %25 : vector<32x8xf32>
    %27 = arith.addf %26, %20 : vector<32x8xf32>
    %c0_20 = arith.constant 0 : index
    %c0_21 = arith.constant 0 : index
    %28 = vector.load %arg9[%c0_20, %c0_21] : memref<8x128xf32, #tpu.memory_space<vmem>>, vector<8x128xf32>
    %cst_22 = arith.constant dense<0.000000e+00> : vector<32x128xf32>
    %29 = tpu.matmul %27, %28, %cst_22 {dimension_numbers = #tpu.dot_dimension_numbers<[1], [0], [0], [1], [0, 0, 1, 1], [], []>} : vector<32x8xf32>, vector<8x128xf32>, vector<32x128xf32> -> vector<32x128xf32>
    %c0_23 = arith.constant 0 : index
    %c0_24 = arith.constant 0 : index
    %30 = vector.load %arg10[%c0_23, %c0_24] : memref<1x128xf32, #tpu.memory_space<vmem>>, vector<1x128xf32>
    %31 = vector.broadcast %30 : vector<1x128xf32> to vector<32x128xf32>
    %32 = arith.addf %29, %31 : vector<32x128xf32>
    %cst_25 = arith.constant 0.000000e+00 : f32
    %33 = vector.broadcast %cst_25 : f32 to vector<32x128xf32>
    %34 = arith.maximumf %32, %33 : vector<32x128xf32>
    %c0_26 = arith.constant 0 : index
    %c0_27 = arith.constant 0 : index
    %35 = vector.load %arg11[%c0_26, %c0_27] : memref<128x256xf32, #tpu.memory_space<vmem>>, vector<128x256xf32>
    %cst_28 = arith.constant dense<0.000000e+00> : vector<32x256xf32>
    %36 = tpu.matmul %34, %35, %cst_28 {dimension_numbers = #tpu.dot_dimension_numbers<[1], [0], [0], [1], [0, 0, 1, 1], [], []>} : vector<32x128xf32>, vector<128x256xf32>, vector<32x256xf32> -> vector<32x256xf32>
    %c0_29 = arith.constant 0 : index
    %c0_30 = arith.constant 0 : index
    %37 = vector.load %arg12[%c0_29, %c0_30] : memref<1x256xf32, #tpu.memory_space<vmem>>, vector<1x256xf32>
    %38 = vector.broadcast %37 : vector<1x256xf32> to vector<32x256xf32>
    %39 = arith.addf %36, %38 : vector<32x256xf32>
    %cst_31 = arith.constant 0.000000e+00 : f32
    %40 = vector.broadcast %cst_31 : f32 to vector<32x256xf32>
    %41 = arith.maximumf %39, %40 : vector<32x256xf32>
    %c0_32 = arith.constant 0 : index
    %c0_33 = arith.constant 0 : index
    %42 = vector.load %arg13[%c0_32, %c0_33] : memref<256x128xf32, #tpu.memory_space<vmem>>, vector<256x128xf32>
    %cst_34 = arith.constant dense<0.000000e+00> : vector<32x128xf32>
    %43 = tpu.matmul %41, %42, %cst_34 {dimension_numbers = #tpu.dot_dimension_numbers<[1], [0], [0], [1], [0, 0, 1, 1], [], []>} : vector<32x256xf32>, vector<256x128xf32>, vector<32x128xf32> -> vector<32x128xf32>
    %c0_35 = arith.constant 0 : index
    %c0_36 = arith.constant 0 : index
    %44 = vector.load %arg14[%c0_35, %c0_36] : memref<1x128xf32, #tpu.memory_space<vmem>>, vector<1x128xf32>
    %45 = vector.broadcast %44 : vector<1x128xf32> to vector<32x128xf32>
    %46 = arith.addf %43, %45 : vector<32x128xf32>
    %47 = arith.addf %19, %46 : vector<32x128xf32>
    %c0_37 = arith.constant 0 : index
    %c0_38 = arith.constant 0 : index
    %48 = vector.load %arg15[%c0_37, %c0_38] : memref<32x128xf32, #tpu.memory_space<vmem>>, vector<32x128xf32>
    tpu.vector_store %arg15[%c0_37, %c0_38], %47 {strides = array<i32>} : memref<32x128xf32, #tpu.memory_space<vmem>>, vector<32x128xf32>,
    return
  }
  func.func @transform_0(%arg0: i32) -> (i32, i32) {
    %c0_i32 = arith.constant 0 : i32
    %c0_i32_0 = arith.constant 0 : i32
    return %arg0, %c0_i32 : i32, i32
  }
  func.func @transform_1(%arg0: i32) -> (i32, i32) {
    %c0_i32 = arith.constant 0 : i32
    %c0_i32_0 = arith.constant 0 : i32
    return %arg0, %c0_i32 : i32, i32
  }
  func.func @transform_2(%arg0: i32) -> (i32, i32) {
    %c0_i32 = arith.constant 0 : i32
    %c0_i32_0 = arith.constant 0 : i32
    %c0_i32_1 = arith.constant 0 : i32
    return %c0_i32, %c0_i32_0 : i32, i32
  }
  func.func @transform_3(%arg0: i32) -> (i32, i32) {
    %c0_i32 = arith.constant 0 : i32
    %c0_i32_0 = arith.constant 0 : i32
    %c0_i32_1 = arith.constant 0 : i32
    return %c0_i32, %c0_i32_0 : i32, i32
  }
  func.func @transform_4(%arg0: i32) -> (i32, i32) {
    %c0_i32 = arith.constant 0 : i32
    %c0_i32_0 = arith.constant 0 : i32
    %c0_i32_1 = arith.constant 0 : i32
    return %c0_i32, %c0_i32_0 : i32, i32
  }
  func.func @transform_5(%arg0: i32) -> (i32, i32) {
    %c0_i32 = arith.constant 0 : i32
    %c0_i32_0 = arith.constant 0 : i32
    %c0_i32_1 = arith.constant 0 : i32
    return %c0_i32, %c0_i32_0 : i32, i32
  }
  func.func @transform_6(%arg0: i32) -> (i32, i32) {
    %c0_i32 = arith.constant 0 : i32
    %c0_i32_0 = arith.constant 0 : i32
    %c0_i32_1 = arith.constant 0 : i32
    return %c0_i32, %c0_i32_0 : i32, i32
  }
  func.func @transform_7(%arg0: i32) -> (i32, i32) {
    %c0_i32 = arith.constant 0 : i32
    %c0_i32_0 = arith.constant 0 : i32
    %c0_i32_1 = arith.constant 0 : i32
    return %c0_i32, %c0_i32_0 : i32, i32
  }
  func.func @transform_8(%arg0: i32) -> (i32, i32) {
    %c0_i32 = arith.constant 0 : i32
    %c0_i32_0 = arith.constant 0 : i32
    %c0_i32_1 = arith.constant 0 : i32
    return %c0_i32, %c0_i32_0 : i32, i32
  }
  func.func @transform_9(%arg0: i32) -> (i32, i32) {
    %c0_i32 = arith.constant 0 : i32
    %c0_i32_0 = arith.constant 0 : i32
    %c0_i32_1 = arith.constant 0 : i32
    return %c0_i32, %c0_i32_0 : i32, i32
  }
  func.func @transform_10(%arg0: i32) -> (i32, i32) {
    %c0_i32 = arith.constant 0 : i32
    %c0_i32_0 = arith.constant 0 : i32
    %c0_i32_1 = arith.constant 0 : i32
    return %c0_i32, %c0_i32_0 : i32, i32
  }
  func.func @transform_11(%arg0: i32) -> (i32, i32) {
    %c0_i32 = arith.constant 0 : i32
    %c0_i32_0 = arith.constant 0 : i32
    %c0_i32_1 = arith.constant 0 : i32
    return %c0_i32, %c0_i32_0 : i32, i32
  }
  func.func @transform_12(%arg0: i32) -> (i32, i32) {
    %c0_i32 = arith.constant 0 : i32
    %c0_i32_0 = arith.constant 0 : i32
    %c0_i32_1 = arith.constant 0 : i32
    return %c0_i32, %c0_i32_0 : i32, i32
  }
  func.func @transform_13(%arg0: i32) -> (i32, i32) {
    %c0_i32 = arith.constant 0 : i32
    %c0_i32_0 = arith.constant 0 : i32
    %c0_i32_1 = arith.constant 0 : i32
    return %c0_i32, %c0_i32_0 : i32, i32
  }
  func.func @transform_14(%arg0: i32) -> (i32, i32) {
    %c0_i32 = arith.constant 0 : i32
    %c0_i32_0 = arith.constant 0 : i32
    return %arg0, %c0_i32 : i32, i32
  }
}

</mosaic_0001>

<llo_original>
// kernel: tpu_custom_call.1
$region0: #{tpu_custom_call.1}
  #allocation0 [shape = 'u32[]', space=smem, size = 0x4, offset = 0x4, fixed_abs, tag = 'smem constant byte address 0x4 - core index']
  #allocation1 [shape = 'u32[72,128]{1,0:T(1,128)}', space=vmem, size = 0x9000, scoped, tag = 'internal scratch']
  %s0 = inlined_call_operand.vmem [shape: f32[64,16], index: 0, kind: input, shape index: {}]
  %s1 = inlined_call_operand.vmem [shape: f32[64,8], index: 1, kind: input, shape index: {}]
  %s2 = inlined_call_operand.hbm [shape: f32[16,256], index: 2, kind: input, shape index: {}]
  %s3 = inlined_call_operand.vmem [shape: f32[1,256], index: 3, kind: input, shape index: {}]
  %s4 = inlined_call_operand.hbm [shape: f32[256,128], index: 4, kind: input, shape index: {}]
  %s5 = inlined_call_operand.vmem [shape: f32[1,128], index: 5, kind: input, shape index: {}]
  %s6 = inlined_call_operand.vmem [shape: f32[128,128], index: 6, kind: input, shape index: {}]
  %s7 = inlined_call_operand.vmem [shape: f32[1,128], index: 7, kind: input, shape index: {}]
  %s8 = inlined_call_operand.vmem [shape: f32[8,128], index: 8, kind: input, shape index: {}]
  %s9 = inlined_call_operand.vmem [shape: f32[1,128], index: 9, kind: input, shape index: {}]
  %s10 = inlined_call_operand.hbm [shape: f32[128,256], index: 10, kind: input, shape index: {}]
  %s11 = inlined_call_operand.vmem [shape: f32[1,256], index: 11, kind: input, shape index: {}]
  %s12 = inlined_call_operand.hbm [shape: f32[256,128], index: 12, kind: input, shape index: {}]
  %s13 = inlined_call_operand.vmem [shape: f32[1,128], index: 13, kind: input, shape index: {}]
  %s14 = inlined_call_operand.hbm [shape: f32[64,128], index: 14, kind: output, shape index: {}]
  %s15 = sld [smem:[#allocation0]]
  $region105: #{tpu_custom_call.1} parent=0
    _
  %s17 = ssub.s32 1, %s15
  %s18 = scalar_select 0, %s17, %s15
  $region1: #{tpu_custom_call.1} parent=0
    #allocation2 [shape = 'u8[16384]{0}', space=vmem, size = 0x4000, scoped, tag = 'input window, operand 2, single buffered']
    #allocation3 [shape = 's32[2]{0}', space=sflag, size = 0x8, scoped, tag = 'scoped memory for tpu_custom_call.1']
    #allocation4 [shape = 's32[2]{0}', space=sflag, size = 0x8, scoped, tag = 'scoped memory for tpu_custom_call.1']
    #allocation5 [shape = 'u8[131072]{0}', space=vmem, size = 0x20000, scoped, tag = 'input window, operand 4, single buffered']
    #allocation6 [shape = 's32[1]{0}', space=sflag, size = 0x4, scoped, tag = 'scoped memory for tpu_custom_call.1']
    #allocation7 [shape = 'u8[131072]{0}', space=vmem, size = 0x20000, scoped, tag = 'input window, operand 10, single buffered']
    #allocation8 [shape = 'u8[131072]{0}', space=vmem, size = 0x20000, scoped, tag = 'input window, operand 12, single buffered']
    #allocation9 [shape = 's32[1]{0}', space=sflag, size = 0x4, scoped, tag = 'scoped memory for tpu_custom_call.1']
    #allocation10 [shape = 'u8[32768]{0}', space=vmem, size = 0x8000, scoped, tag = 'output window, operand 0']
    %19 = vsyncpa [#allocation3], 0
    %20 = vsyncpa [#allocation6], 0
    %21 = vsyncpa [#allocation9], 0
    %22 = vsyncpa [#allocation4], 0
    %s23 = scalar_lea.sflag [#allocation4], 1
    %24 = vsyncpa %s23, 0
    loop: start=0, step=1, limit=4
    $region2: #{tpu_custom_call.1} parent=1 // loop_pre_header
      _
    $region3: #{tpu_custom_call.1} parent=1 // loop_header
      %s26 = sphi 0, %s30
      %p27 = scmp.ge.s32.totalorder %s26, 4
      %s36 = sphi 0, %s38
      %s39 = sphi 0, %s36
      %s40 = sphi 0, %s39
      %s56 = sphi 0, %s40
      %s62 = sphi 0, %s64
      %s65 = sphi 0, %s62
      %s66 = sphi 0, %s65
      %s82 = sphi 0, %s66
      %s86 = sphi 0, %s86
      %s88 = sphi 0, %s86
      %s89 = sphi 0, %s88
      %s103 = sphi 0, %s89
      %s107 = sphi 0, %s107
      %s109 = sphi 0, %s107
      %s110 = sphi 0, %s109
      %s124 = sphi 0, %s110
      %s128 = sphi 0, %s128
      %s130 = sphi 0, %s128
      %s131 = sphi 0, %s130
      %s145 = sphi 0, %s131
      %s149 = sphi 0, %s149
      %s151 = sphi 0, %s149
      %s152 = sphi 0, %s151
      %s166 = sphi 0, %s152
      %s170 = sphi 0, %s170
      %s172 = sphi 0, %s170
      %s173 = sphi 0, %s172
      %s187 = sphi 0, %s173
      %s191 = sphi 0, %s191
      %s193 = sphi 0, %s191
      %s194 = sphi 0, %s193
      %s208 = sphi 0, %s194
      %s212 = sphi 0, %s212
      %s214 = sphi 0, %s212
      %s215 = sphi 0, %s214
      %s229 = sphi 0, %s215
      %s233 = sphi 0, %s233
      %s235 = sphi 0, %s233
      %s236 = sphi 0, %s235
      %s250 = sphi 0, %s236
      %s254 = sphi 0, %s254
      %s256 = sphi 0, %s254
      %s257 = sphi 0, %s256
      %s271 = sphi 0, %s257
      %s275 = sphi 0, %s275
      %s277 = sphi 0, %s275
      %s278 = sphi 0, %s277
      %s292 = sphi 0, %s278
      %s296 = sphi 0, %s296
      %s298 = sphi 0, %s296
      %s299 = sphi 0, %s298
      %s313 = sphi 0, %s299
      %s317 = sphi 0, %s317
      %s319 = sphi 0, %s317
      %s320 = sphi 0, %s319
      %s334 = sphi 0, %s320
      %s340 = sphi 0, %s342
      %s343 = sphi 0, %s340
      %s344 = sphi 0, %s343
      %s360 = sphi 0, %s344
    $region4: #{tpu_custom_call.1} parent=1 // loop_header_branch
      %29 = sbr.rel (%p27) target = $region8
    $region5: #{tpu_custom_call.1} parent=1 // loop_body
      %s31 = ssub.s32 %s26, 1
      %s32 = ssub.s32 %s26, 2
      %s33 = sadd.s32 %s26, 1
      %s34 = ssub.s32 %s26, %s33
      %p35 = scmp.eq.s32.totalorder %s34, 0
      %s37 = sadd.s32 %s36, 1
      %s38 = scalar_select %p35, %s36, %s37
      %p41 = pneg %p35
      %p42 = scmp.eq.s32.totalorder %s26, 1
      %p43 = por %p41, %p42
      %p44 = scmp.ne.s32.totalorder %s36, %s39
      %p45 = scmp.eq.s32.totalorder %s26, 0
      %p46 = por %p44, %p45
      %p47 = scmp.ne.s32.totalorder %s36, %s39
      %p48 = scmp.eq.s32.totalorder %s31, 1
      %p49 = por %p47, %p48
      %p50 = scmp.ne.s32.totalorder %s39, %s40
      %p51 = scmp.eq.s32.totalorder %s31, 0
      %p52 = por %p50, %p51
      %p53 = scmp.ne.s32.totalorder %s39, %s40
      %p54 = scmp.eq.s32.totalorder %s32, 1
      %p55 = por %p53, %p54
      %p57 = scmp.ne.s32.totalorder %s40, %s56
      %p58 = scmp.eq.s32.totalorder %s32, 0
      %p59 = por %p57, %p58
      %s60 = ssub.s32 %s26, %s33
      %p61 = scmp.eq.s32.totalorder %s60, 0
      %s63 = sadd.s32 %s62, 1
      %s64 = scalar_select %p61, %s62, %s63
      %p67 = pneg %p61
      %p68 = scmp.eq.s32.totalorder %s26, 1
      %p69 = por %p67, %p68
      %p70 = scmp.ne.s32.totalorder %s62, %s65
      %p71 = scmp.eq.s32.totalorder %s26, 0
      %p72 = por %p70, %p71
      %p73 = scmp.ne.s32.totalorder %s62, %s65
      %p74 = scmp.eq.s32.totalorder %s31, 1
      %p75 = por %p73, %p74
      %p76 = scmp.ne.s32.totalorder %s65, %s66
      %p77 = scmp.eq.s32.totalorder %s31, 0
      %p78 = por %p76, %p77
      %p79 = scmp.ne.s32.totalorder %s65, %s66
      %p80 = scmp.eq.s32.totalorder %s32, 1
      %p81 = por %p79, %p80
      %p83 = scmp.ne.s32.totalorder %s66, %s82
      %p84 = scmp.eq.s32.totalorder %s32, 0
      %p85 = por %p83, %p84
      %s87 = sadd.s32 %s86, 1
      %p90 = scmp.eq.s32.totalorder %s26, 1
      %p91 = scmp.ne.s32.totalorder %s86, %s88
      %p92 = scmp.eq.s32.totalorder %s26, 0
      %p93 = por %p91, %p92
      %p94 = scmp.ne.s32.totalorder %s86, %s88
      %p95 = scmp.eq.s32.totalorder %s31, 1
      %p96 = por %p94, %p95
      %p97 = scmp.ne.s32.totalorder %s88, %s89
      %p98 = scmp.eq.s32.totalorder %s31, 0
      %p99 = por %p97, %p98
      %p100 = scmp.ne.s32.totalorder %s88, %s89
      %p101 = scmp.eq.s32.totalorder %s32, 1
      %p102 = por %p100, %p101
      %p104 = scmp.ne.s32.totalorder %s89, %s103
      %p105 = scmp.eq.s32.totalorder %s32, 0
      %p106 = por %p104, %p105
      %s108 = sadd.s32 %s107, 1
      %p111 = scmp.eq.s32.totalorder %s26, 1
      %p112 = scmp.ne.s32.totalorder %s107, %s109
      %p113 = scmp.eq.s32.totalorder %s26, 0
      %p114 = por %p112, %p113
      %p115 = scmp.ne.s32.totalorder %s107, %s109
      %p116 = scmp.eq.s32.totalorder %s31, 1
      %p117 = por %p115, %p116
      %p118 = scmp.ne.s32.totalorder %s109, %s110
      %p119 = scmp.eq.s32.totalorder %s31, 0
      %p120 = por %p118, %p119
      %p121 = scmp.ne.s32.totalorder %s109, %s110
      %p122 = scmp.eq.s32.totalorder %s32, 1
      %p123 = por %p121, %p122
      %p125 = scmp.ne.s32.totalorder %s110, %s124
      %p126 = scmp.eq.s32.totalorder %s32, 0
      %p127 = por %p125, %p126
      %s129 = sadd.s32 %s128, 1
      %p132 = scmp.eq.s32.totalorder %s26, 1
      %p133 = scmp.ne.s32.totalorder %s128, %s130
      %p134 = scmp.eq.s32.totalorder %s26, 0
      %p135 = por %p133, %p134
      %p136 = scmp.ne.s32.totalorder %s128, %s130
      %p137 = scmp.eq.s32.totalorder %s31, 1
      %p138 = por %p136, %p137
      %p139 = scmp.ne.s32.totalorder %s130, %s131
      %p140 = scmp.eq.s32.totalorder %s31, 0
      %p141 = por %p139, %p140
      %p142 = scmp.ne.s32.totalorder %s130, %s131
      %p143 = scmp.eq.s32.totalorder %s32, 1
      %p144 = por %p142, %p143
      %p146 = scmp.ne.s32.totalorder %s131, %s145
      %p147 = scmp.eq.s32.totalorder %s32, 0
      %p148 = por %p146, %p147
      %s150 = sadd.s32 %s149, 1
      %p153 = scmp.eq.s32.totalorder %s26, 1
      %p154 = scmp.ne.s32.totalorder %s149, %s151
      %p155 = scmp.eq.s32.totalorder %s26, 0
      %p156 = por %p154, %p155
      %p157 = scmp.ne.s32.totalorder %s149, %s151
      %p158 = scmp.eq.s32.totalorder %s31, 1
      %p159 = por %p157, %p158
      %p160 = scmp.ne.s32.totalorder %s151, %s152
      %p161 = scmp.eq.s32.totalorder %s31, 0
      %p162 = por %p160, %p161
      %p163 = scmp.ne.s32.totalorder %s151, %s152
      %p164 = scmp.eq.s32.totalorder %s32, 1
      %p165 = por %p163, %p164
      %p167 = scmp.ne.s32.totalorder %s152, %s166
      %p168 = scmp.eq.s32.totalorder %s32, 0
      %p169 = por %p167, %p168
      %s171 = sadd.s32 %s170, 1
      %p174 = scmp.eq.s32.totalorder %s26, 1
      %p175 = scmp.ne.s32.totalorder %s170, %s172
      %p176 = scmp.eq.s32.totalorder %s26, 0
      %p177 = por %p175, %p176
      %p178 = scmp.ne.s32.totalorder %s170, %s172
      %p179 = scmp.eq.s32.totalorder %s31, 1
      %p180 = por %p178, %p179
      %p181 = scmp.ne.s32.totalorder %s172, %s173
      %p182 = scmp.eq.s32.totalorder %s31, 0
      %p183 = por %p181, %p182
      %p184 = scmp.ne.s32.totalorder %s172, %s173
      %p185 = scmp.eq.s32.totalorder %s32, 1
      %p186 = por %p184, %p185
      %p188 = scmp.ne.s32.totalorder %s173, %s187
      %p189 = scmp.eq.s32.totalorder %s32, 0
      %p190 = por %p188, %p189
      %s192 = sadd.s32 %s191, 1
      %p195 = scmp.eq.s32.totalorder %s26, 1
      %p196 = scmp.ne.s32.totalorder %s191, %s193
      %p197 = scmp.eq.s32.totalorder %s26, 0
      %p198 = por %p196, %p197
      %p199 = scmp.ne.s32.totalorder %s191, %s193
      %p200 = scmp.eq.s32.totalorder %s31, 1
      %p201 = por %p199, %p200
      %p202 = scmp.ne.s32.totalorder %s193, %s194
      %p203 = scmp.eq.s32.totalorder %s31, 0
      %p204 = por %p202, %p203
      %p205 = scmp.ne.s32.totalorder %s193, %s194
      %p206 = scmp.eq.s32.totalorder %s32, 1
      %p207 = por %p205, %p206
      %p209 = scmp.ne.s32.totalorder %s194, %s208
      %p210 = scmp.eq.s32.totalorder %s32, 0
      %p211 = por %p209, %p210
      %s213 = sadd.s32 %s212, 1
      %p216 = scmp.eq.s32.totalorder %s26, 1
      %p217 = scmp.ne.s32.totalorder %s212, %s214
      %p218 = scmp.eq.s32.totalorder %s26, 0
      %p219 = por %p217, %p218
      %p220 = scmp.ne.s32.totalorder %s212, %s214
      %p221 = scmp.eq.s32.totalorder %s31, 1
      %p222 = por %p220, %p221
      %p223 = scmp.ne.s32.totalorder %s214, %s215
      %p224 = scmp.eq.s32.totalorder %s31, 0
      %p225 = por %p223, %p224
      %p226 = scmp.ne.s32.totalorder %s214, %s215
      %p227 = scmp.eq.s32.totalorder %s32, 1
      %p228 = por %p226, %p227
      %p230 = scmp.ne.s32.totalorder %s215, %s229
      %p231 = scmp.eq.s32.totalorder %s32, 0
      %p232 = por %p230, %p231
      %s234 = sadd.s32 %s233, 1
      %p237 = scmp.eq.s32.totalorder %s26, 1
      %p238 = scmp.ne.s32.totalorder %s233, %s235
      %p239 = scmp.eq.s32.totalorder %s26, 0
      %p240 = por %p238, %p239
      %p241 = scmp.ne.s32.totalorder %s233, %s235
      %p242 = scmp.eq.s32.totalorder %s31, 1
      %p243 = por %p241, %p242
      %p244 = scmp.ne.s32.totalorder %s235, %s236
      %p245 = scmp.eq.s32.totalorder %s31, 0
      %p246 = por %p244, %p245
      %p247 = scmp.ne.s32.totalorder %s235, %s236
      %p248 = scmp.eq.s32.totalorder %s32, 1
      %p249 = por %p247, %p248
      %p251 = scmp.ne.s32.totalorder %s236, %s250
      %p252 = scmp.eq.s32.totalorder %s32, 0
      %p253 = por %p251, %p252
      %s255 = sadd.s32 %s254, 1
      %p258 = scmp.eq.s32.totalorder %s26, 1
      %p259 = scmp.ne.s32.totalorder %s254, %s256
      %p260 = scmp.eq.s32.totalorder %s26, 0
      %p261 = por %p259, %p260
      %p262 = scmp.ne.s32.totalorder %s254, %s256
      %p263 = scmp.eq.s32.totalorder %s31, 1
      %p264 = por %p262, %p263
      %p265 = scmp.ne.s32.totalorder %s256, %s257
      %p266 = scmp.eq.s32.totalorder %s31, 0
      %p267 = por %p265, %p266
      %p268 = scmp.ne.s32.totalorder %s256, %s257
      %p269 = scmp.eq.s32.totalorder %s32, 1
      %p270 = por %p268, %p269
      %p272 = scmp.ne.s32.totalorder %s257, %s271
      %p273 = scmp.eq.s32.totalorder %s32, 0
      %p274 = por %p272, %p273
      %s276 = sadd.s32 %s275, 1
      %p279 = scmp.eq.s32.totalorder %s26, 1
      %p280 = scmp.ne.s32.totalorder %s275, %s277
      %p281 = scmp.eq.s32.totalorder %s26, 0
      %p282 = por %p280, %p281
      %p283 = scmp.ne.s32.totalorder %s275, %s277
      %p284 = scmp.eq.s32.totalorder %s31, 1
      %p285 = por %p283, %p284
      %p286 = scmp.ne.s32.totalorder %s277, %s278
      %p287 = scmp.eq.s32.totalorder %s31, 0
      %p288 = por %p286, %p287
      %p289 = scmp.ne.s32.totalorder %s277, %s278
      %p290 = scmp.eq.s32.totalorder %s32, 1
      %p291 = por %p289, %p290
      %p293 = scmp.ne.s32.totalorder %s278, %s292
      %p294 = scmp.eq.s32.totalorder %s32, 0
      %p295 = por %p293, %p294
      %s297 = sadd.s32 %s296, 1
      %p300 = scmp.eq.s32.totalorder %s26, 1
      %p301 = scmp.ne.s32.totalorder %s296, %s298
      %p302 = scmp.eq.s32.totalorder %s26, 0
      %p303 = por %p301, %p302
      %p304 = scmp.ne.s32.totalorder %s296, %s298
      %p305 = scmp.eq.s32.totalorder %s31, 1
      %p306 = por %p304, %p305
      %p307 = scmp.ne.s32.totalorder %s298, %s299
      %p308 = scmp.eq.s32.totalorder %s31, 0
      %p309 = por %p307, %p308
      %p310 = scmp.ne.s32.totalorder %s298, %s299
      %p311 = scmp.eq.s32.totalorder %s32, 1
      %p312 = por %p310, %p311
      %p314 = scmp.ne.s32.totalorder %s299, %s313
      %p315 = scmp.eq.s32.totalorder %s32, 0
      %p316 = por %p314, %p315
      %s318 = sadd.s32 %s317, 1
      %p321 = scmp.eq.s32.totalorder %s26, 1
      %p322 = scmp.ne.s32.totalorder %s317, %s319
      %p323 = scmp.eq.s32.totalorder %s26, 0
      %p324 = por %p322, %p323
      %p325 = scmp.ne.s32.totalorder %s317, %s319
      %p326 = scmp.eq.s32.totalorder %s31, 1
      %p327 = por %p325, %p326
      %p328 = scmp.ne.s32.totalorder %s319, %s320
      %p329 = scmp.eq.s32.totalorder %s31, 0
      %p330 = por %p328, %p329
      %p331 = scmp.ne.s32.totalorder %s319, %s320
      %p332 = scmp.eq.s32.totalorder %s32, 1
      %p333 = por %p331, %p332
      %p335 = scmp.ne.s32.totalorder %s320, %s334
      %p336 = scmp.eq.s32.totalorder %s32, 0
      %p337 = por %p335, %p336
      %s338 = ssub.s32 %s26, %s33
      %p339 = scmp.eq.s32.totalorder %s338, 0
      %s341 = sadd.s32 %s340, 1
      %s342 = scalar_select %p339, %s340, %s341
      %p345 = pneg %p339
      %p346 = scmp.eq.s32.totalorder %s26, 1
      %p347 = por %p345, %p346
      %p348 = scmp.ne.s32.totalorder %s340, %s343
      %p349 = scmp.eq.s32.totalorder %s26, 0
      %p350 = por %p348, %p349
      %p351 = scmp.ne.s32.totalorder %s340, %s343
      %p352 = scmp.eq.s32.totalorder %s31, 1
      %p353 = por %p351, %p352
      %p354 = scmp.ne.s32.totalorder %s343, %s344
      %p355 = scmp.eq.s32.totalorder %s31, 0
      %p356 = por %p354, %p355
      %p357 = scmp.ne.s32.totalorder %s343, %s344
      %p358 = scmp.eq.s32.totalorder %s32, 1
      %p359 = por %p357, %p358
      %p361 = scmp.ne.s32.totalorder %s344, %s360
      %p362 = scmp.eq.s32.totalorder %s32, 0
      %p363 = por %p361, %p362
      %p364 = scmp.le.s32.totalorder 1, %s26
      %p365 = scmp.lt.s32.totalorder %s26, 3
      %p366 = pnand %p364, %p365
      %p367 = pneg %p366
      // Predicated region
      $region9: #{tpu_custom_call.1} parent=5 // pred_check
        _
      $region10: #{tpu_custom_call.1} parent=5 // pred_check_branch
        %369 = sbr.rel (%p366) target = $region12
      $region11: #{tpu_custom_call.1} parent=5 // pred_region
        %s370 = ssub.s32 %s26, 1
        // Predicated region
        $region13: #{tpu_custom_call.1} parent=11 // pred_check
          %p371 = pneg %p99
        $region14: #{tpu_custom_call.1} parent=11 // pred_check_branch
          %373 = sbr.rel (%p371) target = $region16
        $region15: #{tpu_custom_call.1} parent=11 // pred_region
          %375 = vsyncadd [#allocation3], 0
          %s376 = sshll.u32 %s2, 4
          %s377 = int_to_ptr.hbm [resolvable:$true] %s376
          %s378 = sshll.u32 [#allocation2], 4
          %s379 = int_to_ptr.vmem [resolvable:$true] %s378
          %384 = dma.hbm_to_vmem [thread:$0]  %s377, 512, %s379, [#allocation3], 256, 256, 16
        $region16: #{tpu_custom_call.1} parent=11 // pred_fallthru
          _
        // Predicated region
        $region17: #{tpu_custom_call.1} parent=11 // pred_check
          %p385 = pneg %p120
        $region18: #{tpu_custom_call.1} parent=11 // pred_check_branch
          %387 = sbr.rel (%p385) target = $region20
        $region19: #{tpu_custom_call.1} parent=11 // pred_region
          _
        $region20: #{tpu_custom_call.1} parent=11 // pred_fallthru
          _
        // Predicated region
        $region21: #{tpu_custom_call.1} parent=11 // pred_check
          %p388 = pneg %p141
        $region22: #{tpu_custom_call.1} parent=11 // pred_check_branch
          %390 = sbr.rel (%p388) target = $region24
        $region23: #{tpu_custom_call.1} parent=11 // pred_region
          %392 = vsyncadd [#allocation6], 0
          %s393 = sshll.u32 %s4, 4
          %s394 = int_to_ptr.hbm [resolvable:$true] %s393
          %s395 = sshll.u32 [#allocation5], 4
          %s396 = int_to_ptr.vmem [resolvable:$true] %s395
          %401 = dma.hbm_to_vmem [thread:$0]  %s394, 4096, %s396, [#allocation6], 128, 128, 8
        $region24: #{tpu_custom_call.1} parent=11 // pred_fallthru
          _
        // Predicated region
        $region25: #{tpu_custom_call.1} parent=11 // pred_check
          %p402 = pneg %p162
        $region26: #{tpu_custom_call.1} parent=11 // pred_check_branch
          %404 = sbr.rel (%p402) target = $region28
        $region27: #{tpu_custom_call.1} parent=11 // pred_region
          _
        $region28: #{tpu_custom_call.1} parent=11 // pred_fallthru
          _
        // Predicated region
        $region29: #{tpu_custom_call.1} parent=11 // pred_check
          %p405 = pneg %p183
        $region30: #{tpu_custom_call.1} parent=11 // pred_check_branch
          %407 = sbr.rel (%p405) target = $region32
        $region31: #{tpu_custom_call.1} parent=11 // pred_region
          _
        $region32: #{tpu_custom_call.1} parent=11 // pred_fallthru
          _
        // Predicated region
        $region33: #{tpu_custom_call.1} parent=11 // pred_check
          %p408 = pneg %p204
        $region34: #{tpu_custom_call.1} parent=11 // pred_check_branch
          %410 = sbr.rel (%p408) target = $region36
        $region35: #{tpu_custom_call.1} parent=11 // pred_region
          _
        $region36: #{tpu_custom_call.1} parent=11 // pred_fallthru
          _
        // Predicated region
        $region37: #{tpu_custom_call.1} parent=11 // pred_check
          %p411 = pneg %p225
        $region38: #{tpu_custom_call.1} parent=11 // pred_check_branch
          %413 = sbr.rel (%p411) target = $region40
        $region39: #{tpu_custom_call.1} parent=11 // pred_region
          _
        $region40: #{tpu_custom_call.1} parent=11 // pred_fallthru
          _
        // Predicated region
        $region41: #{tpu_custom_call.1} parent=11 // pred_check
          %p414 = pneg %p246
        $region42: #{tpu_custom_call.1} parent=11 // pred_check_branch
          %416 = sbr.rel (%p414) target = $region44
        $region43: #{tpu_custom_call.1} parent=11 // pred_region
          _
        $region44: #{tpu_custom_call.1} parent=11 // pred_fallthru
          _
        // Predicated region
        $region45: #{tpu_custom_call.1} parent=11 // pred_check
          %p417 = pneg %p267
        $region46: #{tpu_custom_call.1} parent=11 // pred_check_branch
          %419 = sbr.rel (%p417) target = $region48
        $region47: #{tpu_custom_call.1} parent=11 // pred_region
          %421 = vsyncadd [#allocation6], 0
          %s422 = sshll.u32 %s10, 4
          %s423 = int_to_ptr.hbm [resolvable:$true] %s422
          %s424 = sshll.u32 [#allocation7], 4
          %s425 = int_to_ptr.vmem [resolvable:$true] %s424
          %430 = dma.hbm_to_vmem [thread:$0]  %s423, 4096, %s425, [#allocation6], 256, 256, 16
        $region48: #{tpu_custom_call.1} parent=11 // pred_fallthru
          _
        // Predicated region
        $region49: #{tpu_custom_call.1} parent=11 // pred_check
          %p431 = pneg %p288
        $region50: #{tpu_custom_call.1} parent=11 // pred_check_branch
          %433 = sbr.rel (%p431) target = $region52
        $region51: #{tpu_custom_call.1} parent=11 // pred_region
          _
        $region52: #{tpu_custom_call.1} parent=11 // pred_fallthru
          _
        // Predicated region
        $region53: #{tpu_custom_call.1} parent=11 // pred_check
          %p434 = pneg %p309
        $region54: #{tpu_custom_call.1} parent=11 // pred_check_branch
          %436 = sbr.rel (%p434) target = $region56
        $region55: #{tpu_custom_call.1} parent=11 // pred_region
          %438 = vsyncadd [#allocation9], 0
          %s439 = sshll.u32 %s12, 4
          %s440 = int_to_ptr.hbm [resolvable:$true] %s439
          %s441 = sshll.u32 [#allocation8], 4
          %s442 = int_to_ptr.vmem [resolvable:$true] %s441
          %447 = dma.hbm_to_vmem [thread:$0]  %s440, 4096, %s442, [#allocation9], 128, 128, 8
        $region56: #{tpu_custom_call.1} parent=11 // pred_fallthru
          _
        // Predicated region
        $region57: #{tpu_custom_call.1} parent=11 // pred_check
          %p448 = pneg %p330
        $region58: #{tpu_custom_call.1} parent=11 // pred_check_branch
          %450 = sbr.rel (%p448) target = $region60
        $region59: #{tpu_custom_call.1} parent=11 // pred_region
          _
        $region60: #{tpu_custom_call.1} parent=11 // pred_fallthru
          _
      $region12: #{tpu_custom_call.1} parent=5 // pred_fallthru
        _
      %p451 = scmp.lt.s32.totalorder %s26, 2
      // Predicated region
      $region61: #{tpu_custom_call.1} parent=5 // pred_check
        %p452 = pneg %p451
      $region62: #{tpu_custom_call.1} parent=5 // pred_check_branch
        %454 = sbr.rel (%p452) target = $region64
      $region63: #{tpu_custom_call.1} parent=5 // pred_region
        // Predicated region
        $region65: #{tpu_custom_call.1} parent=63 // pred_check
          %p455 = pneg %p46
        $region66: #{tpu_custom_call.1} parent=63 // pred_check_branch
          %457 = sbr.rel (%p455) target = $region68
        $region67: #{tpu_custom_call.1} parent=63 // pred_region
          %s458 = smul.u32 4, %s26
          %p459 = scmp.lt.s32.totalorder %s458, 7
          %s460 = scalar_select %p459, %s458, 7
          %s461 = smul.addr %s460, 8
          %s462 = scalar_lea.vmem %s0, %s461
          %s463 = smul.u32 4, %s26
        $region68: #{tpu_custom_call.1} parent=63 // pred_fallthru
          _
        // Predicated region
        $region69: #{tpu_custom_call.1} parent=63 // pred_check
          %p464 = pneg %p72
        $region70: #{tpu_custom_call.1} parent=63 // pred_check_branch
          %466 = sbr.rel (%p464) target = $region72
        $region71: #{tpu_custom_call.1} parent=63 // pred_region
          %s467 = smul.u32 4, %s26
          %p468 = scmp.lt.s32.totalorder %s467, 7
          %s469 = scalar_select %p468, %s467, 7
          %s470 = smul.addr %s469, 8
          %s471 = scalar_lea.vmem %s1, %s470
          %s472 = smul.u32 4, %s26
        $region72: #{tpu_custom_call.1} parent=63 // pred_fallthru
          _
      $region64: #{tpu_custom_call.1} parent=5 // pred_fallthru
        _
      %p473 = scmp.le.s32.totalorder 1, %s26
      %p474 = scmp.lt.s32.totalorder %s26, 3
      %p475 = pnand %p473, %p474
      %p476 = pneg %p475
      // Predicated region
      $region73: #{tpu_custom_call.1} parent=5 // pred_check
        _
      $region74: #{tpu_custom_call.1} parent=5 // pred_check_branch
        %478 = sbr.rel (%p475) target = $region76
      $region75: #{tpu_custom_call.1} parent=5 // pred_region
        %s479 = ssub.s32 %s26, 1
        // Predicated region
        $region77: #{tpu_custom_call.1} parent=75 // pred_check
          %p480 = pneg %p99
        $region78: #{tpu_custom_call.1} parent=75 // pred_check_branch
          %482 = sbr.rel (%p480) target = $region80
        $region79: #{tpu_custom_call.1} parent=75 // pred_region
          %484 = dma.done [#allocation3], 512
        $region80: #{tpu_custom_call.1} parent=75 // pred_fallthru
          _
        // Predicated region
        $region81: #{tpu_custom_call.1} parent=75 // pred_check
          %p485 = pneg %p141
        $region82: #{tpu_custom_call.1} parent=75 // pred_check_branch
          %487 = sbr.rel (%p485) target = $region84
        $region83: #{tpu_custom_call.1} parent=75 // pred_region
          %489 = dma.done [#allocation6], 4096
        $region84: #{tpu_custom_call.1} parent=75 // pred_fallthru
          _
        // Predicated region
        $region85: #{tpu_custom_call.1} parent=75 // pred_check
          %p490 = pneg %p267
        $region86: #{tpu_custom_call.1} parent=75 // pred_check_branch
          %492 = sbr.rel (%p490) target = $region88
        $region87: #{tpu_custom_call.1} parent=75 // pred_region
          %494 = dma.done [#allocation6], 4096
        $region88: #{tpu_custom_call.1} parent=75 // pred_fallthru
          _
        // Predicated region
        $region89: #{tpu_custom_call.1} parent=75 // pred_check
          %p495 = pneg %p309
        $region90: #{tpu_custom_call.1} parent=75 // pred_check_branch
          %497 = sbr.rel (%p495) target = $region92
        $region91: #{tpu_custom_call.1} parent=75 // pred_region
          %499 = dma.done [#allocation9], 4096
        $region92: #{tpu_custom_call.1} parent=75 // pred_fallthru
          _
        %s500 = smul.u32 4, %s31
        %p501 = scmp.lt.s32.totalorder %s500, 7
        %s502 = scalar_select %p501, %s500, 7
        %s503 = smul.addr %s502, 8
        %s504 = scalar_lea.vmem %s0, %s503
        %p505 = pneg %p52
        %p506 = pneg %p49
        %s507 = smul.u32 4, %s31
        %p508 = scmp.lt.s32.totalorder %s507, 7
        %s509 = scalar_select %p508, %s507, 7
        %s510 = smul.addr %s509, 8
        %s511 = scalar_lea.vmem %s1, %s510
        %p512 = pneg %p78
        %p513 = pneg %p75
        %p514 = pneg %p99
        %p515 = pneg %p96
        %p516 = pneg %p120
        %p517 = pneg %p117
        %p518 = pneg %p141
        %p519 = pneg %p138
        %p520 = pneg %p162
        %p521 = pneg %p159
        %p522 = pneg %p183
        %p523 = pneg %p180
        %p524 = pneg %p204
        %p525 = pneg %p201
        %p526 = pneg %p225
        %p527 = pneg %p222
        %p528 = pneg %p246
        %p529 = pneg %p243
        %p530 = pneg %p267
        %p531 = pneg %p264
        %p532 = pneg %p288
        %p533 = pneg %p285
        %p534 = pneg %p309
        %p535 = pneg %p306
        %p536 = pneg %p330
        %p537 = pneg %p327
        %p538 = pneg %p356
        %p539 = pneg %p353
        %s540 = sand.u32 %s343, 1
        %s541 = scalar_lea.sflag [#allocation4], %s540
        %s542 = sand.u32 %s343, 1
        %s543 = smul.addr %s542, 32
        %s544 = scalar_lea.vmem [#allocation10], %s543
        %s545 = smul.u32 4, %s31
        %p546 = scmp.lt.s32.totalorder %s545, 7
        %s547 = scalar_select %p546, %s545, 7
        %s548 = smul.addr %s547, 8
        %s549 = scalar_lea.vmem %s0, %s548
        %s550 = smul.u32 4, %s31
        %s551 = smul.u32 4, %s31
        %p552 = scmp.lt.s32.totalorder %s551, 7
        %s553 = scalar_select %p552, %s551, 7
        %s554 = smul.addr %s553, 8
        %s555 = scalar_lea.vmem %s1, %s554
        %s556 = smul.u32 4, %s31
        %s557 = smul.u32 4, %s31
        %v558 = vld [vmem:[%s549] sm:$0xff]
        %v559 = vld [vmem:[%s549 + $0x8] sm:$0xff]
        %v560 = vld [vmem:[%s549 + $0x10] sm:$0xff]
        %v561 = vld [vmem:[%s549 + $0x18] sm:$0xff]
        %v562 = vld [vmem:[#allocation2] sm:$0xff]
        %v563 = vld [vmem:[#allocation2 + $0x8] sm:$0xff]
        %v564 = vld [vmem:[#allocation2 + $0x10] sm:$0xff]
        %v565 = vld [vmem:[#allocation2 + $0x18] sm:$0xff]
        %v566 = vld [vmem:[%s3] sm:$0x3]
        %v568 = vperm.slane %v566, 0
        %v569 = vperm.slane %v566, 1
        %vm572 = vcmask 130048
        %v574 = vsel %vm572, %v558, 0
        %v577 = vsel %vm572, %v559, 0
        %v580 = vsel %vm572, %v560, 0
        %v583 = vsel %vm572, %v561, 0
        %585 = vmatpush.msra.mxu0 0.0
        %586 = vmatpush.msra.mxu0 0.0
        %587 = vmatpush.msra.mxu0 0.0
        %588 = vmatpush.msra.mxu0 0.0
        %589 = vmatpush.msra.mxu0 0.0
        %590 = vmatpush.msra.mxu0 0.0
        %591 = vmatpush.msra.mxu0 0.0
        %592 = vmatpush.msra.mxu0 0.0
        %593 = vmatpush.msra.mxu0 0.0
        %594 = vmatpush.msra.mxu0 0.0
        %595 = vmatpush.msra.mxu0 0.0
        %596 = vmatpush.msra.mxu0 0.0
        %597 = vmatpush.msra.mxu0 0.0
        %598 = vmatpush.msra.mxu0 0.0
        %599 = vmatpush.msra.mxu0 %v564
        %600 = vmatpush.msra.mxu0 %v562
        %601 = vmatmul.f32.gmra.mxu0 %v574
        %v602 = vpop.f32.mrf.mxu0
        %v603 = vadd.f32 %v568, %v602
        %604 = vmatmul.f32.gmra.mxu0 %v577
        %v605 = vpop.f32.mrf.mxu0
        %v606 = vadd.f32 %v568, %v605
        %607 = vmatmul.f32.gmra.mxu0 %v580
        %v608 = vpop.f32.mrf.mxu0
        %v609 = vadd.f32 %v568, %v608
        %610 = vmatmul.f32.gmra.mxu0 %v583
        %v611 = vpop.f32.mrf.mxu0
        %v612 = vadd.f32 %v568, %v611
        %613 = vdwg.mxu0
        %614 = vmatpush.msra.mxu0 0.0
        %615 = vmatpush.msra.mxu0 0.0
        %616 = vmatpush.msra.mxu0 0.0
        %617 = vmatpush.msra.mxu0 0.0
        %618 = vmatpush.msra.mxu0 0.0
        %619 = vmatpush.msra.mxu0 0.0
        %620 = vmatpush.msra.mxu0 0.0
        %621 = vmatpush.msra.mxu0 0.0
        %622 = vmatpush.msra.mxu0 0.0
        %623 = vmatpush.msra.mxu0 0.0
        %624 = vmatpush.msra.mxu0 0.0
        %625 = vmatpush.msra.mxu0 0.0
        %626 = vmatpush.msra.mxu0 0.0
        %627 = vmatpush.msra.mxu0 0.0
        %628 = vmatpush.msra.mxu0 %v565
        %629 = vmatpush.msra.mxu0 %v563
        %630 = vmatmul.f32.gmra.mxu0 %v574
        %v631 = vpop.f32.mrf.mxu0
        %v632 = vadd.f32 %v569, %v631
        %633 = vmatmul.f32.gmra.mxu0 %v577
        %v634 = vpop.f32.mrf.mxu0
        %v635 = vadd.f32 %v569, %v634
        %636 = vmatmul.f32.gmra.mxu0 %v580
        %v637 = vpop.f32.mrf.mxu0
        %v638 = vadd.f32 %v569, %v637
        %639 = vmatmul.f32.gmra.mxu0 %v583
        %v640 = vpop.f32.mrf.mxu0
        %v641 = vadd.f32 %v569, %v640
        %642 = vdwg.mxu0
        %v643 = vmax.f32 %v603, 0.0
        %v644 = vmax.f32 %v632, 0.0
        %v645 = vmax.f32 %v606, 0.0
        %v646 = vmax.f32 %v635, 0.0
        %v647 = vmax.f32 %v609, 0.0
        %v648 = vmax.f32 %v638, 0.0
        %v649 = vmax.f32 %v612, 0.0
        %v650 = vmax.f32 %v641, 0.0
        %v651 = vld [vmem:[#allocation5] sm:$0xff]
        %v652 = vld [vmem:[#allocation5 + $0x8] sm:$0xff]
        %v653 = vld [vmem:[#allocation5 + $0x10] sm:$0xff]
        %v654 = vld [vmem:[#allocation5 + $0x18] sm:$0xff]
        %v655 = vld [vmem:[#allocation5 + $0x20] sm:$0xff]
        %v656 = vld [vmem:[#allocation5 + $0x28] sm:$0xff]
        %v657 = vld [vmem:[#allocation5 + $0x30] sm:$0xff]
        %v658 = vld [vmem:[#allocation5 + $0x38] sm:$0xff]
        %v659 = vld [vmem:[#allocation5 + $0x40] sm:$0xff]
        %v660 = vld [vmem:[#allocation5 + $0x48] sm:$0xff]
        %v661 = vld [vmem:[#allocation5 + $0x50] sm:$0xff]
        %v662 = vld [vmem:[#allocation5 + $0x58] sm:$0xff]
        %v663 = vld [vmem:[#allocation5 + $0x60] sm:$0xff]
        %v664 = vld [vmem:[#allocation5 + $0x68] sm:$0xff]
        %v665 = vld [vmem:[#allocation5 + $0x70] sm:$0xff]
        %v666 = vld [vmem:[#allocation5 + $0x78] sm:$0xff]
        %v667 = vld [vmem:[#allocation5 + $0x80] sm:$0xff]
        %v668 = vld [vmem:[#allocation5 + $0x88] sm:$0xff]
        %v669 = vld [vmem:[#allocation5 + $0x90] sm:$0xff]
        %v670 = vld [vmem:[#allocation5 + $0x98] sm:$0xff]
        %v671 = vld [vmem:[#allocation5 + $0xa0] sm:$0xff]
        %v672 = vld [vmem:[#allocation5 + $0xa8] sm:$0xff]
        %v673 = vld [vmem:[#allocation5 + $0xb0] sm:$0xff]
        %v674 = vld [vmem:[#allocation5 + $0xb8] sm:$0xff]
        %v675 = vld [vmem:[#allocation5 + $0xc0] sm:$0xff]
        %v676 = vld [vmem:[#allocation5 + $0xc8] sm:$0xff]
        %v677 = vld [vmem:[#allocation5 + $0xd0] sm:$0xff]
        %v678 = vld [vmem:[#allocation5 + $0xd8] sm:$0xff]
        %v679 = vld [vmem:[#allocation5 + $0xe0] sm:$0xff]
        %v680 = vld [vmem:[#allocation5 + $0xe8] sm:$0xff]
        %v681 = vld [vmem:[#allocation5 + $0xf0] sm:$0xff]
        %v682 = vld [vmem:[#allocation5 + $0xf8] sm:$0xff]
        %v683 = vld [vmem:[%s5] sm:$0x1]
        %v685 = vperm.slane %v683, 0
        %687 = vmatpush.msra.mxu0 %v666
        %688 = vmatpush.msra.mxu0 %v665
        %689 = vmatpush.msra.mxu0 %v664
        %690 = vmatpush.msra.mxu0 %v663
        %691 = vmatpush.msra.mxu0 %v662
        %692 = vmatpush.msra.mxu0 %v661
        %693 = vmatpush.msra.mxu0 %v660
        %694 = vmatpush.msra.mxu0 %v659
        %695 = vmatpush.msra.mxu0 %v658
        %696 = vmatpush.msra.mxu0 %v657
        %697 = vmatpush.msra.mxu0 %v656
        %698 = vmatpush.msra.mxu0 %v655
        %699 = vmatpush.msra.mxu0 %v654
        %700 = vmatpush.msra.mxu0 %v653
        %701 = vmatpush.msra.mxu0 %v652
        %702 = vmatpush.msra.mxu0 %v651
        %703 = vmatmul.f32.gmra.mxu0 %v643
        %v704 = vpop.f32.mrf.mxu0
        %v705 = vadd.f32 %v685, %v704
        %706 = vmatmul.f32.gmra.mxu0 %v645
        %v707 = vpop.f32.mrf.mxu0
        %v708 = vadd.f32 %v685, %v707
        %709 = vmatmul.f32.gmra.mxu0 %v647
        %v710 = vpop.f32.mrf.mxu0
        %v711 = vadd.f32 %v685, %v710
        %712 = vmatmul.f32.gmra.mxu0 %v649
        %v713 = vpop.f32.mrf.mxu0
        %v714 = vadd.f32 %v685, %v713
        %715 = vdwg.mxu0
        %716 = vmatpush.msra.mxu0 %v682
        %717 = vmatpush.msra.mxu0 %v681
        %718 = vmatpush.msra.mxu0 %v680
        %719 = vmatpush.msra.mxu0 %v679
        %720 = vmatpush.msra.mxu0 %v678
        %721 = vmatpush.msra.mxu0 %v677
        %722 = vmatpush.msra.mxu0 %v676
        %723 = vmatpush.msra.mxu0 %v675
        %724 = vmatpush.msra.mxu0 %v674
        %725 = vmatpush.msra.mxu0 %v673
        %726 = vmatpush.msra.mxu0 %v672
        %727 = vmatpush.msra.mxu0 %v671
        %728 = vmatpush.msra.mxu0 %v670
        %729 = vmatpush.msra.mxu0 %v669
        %730 = vmatpush.msra.mxu0 %v668
        %731 = vmatpush.msra.mxu0 %v667
        %732 = vmatmul.f32.gmra.mxu0 %v644
        %v733 = vpop.f32.mrf.mxu0
        %v734 = vadd.f32 %v705, %v733
        %735 = vmatmul.f32.gmra.mxu0 %v646
        %v736 = vpop.f32.mrf.mxu0
        %v737 = vadd.f32 %v708, %v736
        %738 = vmatmul.f32.gmra.mxu0 %v648
        %v739 = vpop.f32.mrf.mxu0
        %v740 = vadd.f32 %v711, %v739
        %741 = vmatmul.f32.gmra.mxu0 %v650
        %v742 = vpop.f32.mrf.mxu0
        %v743 = vadd.f32 %v714, %v742
        %744 = vdwg.mxu0
        %v745 = vmax.f32 %v734, 0.0
        %v746 = vmax.f32 %v737, 0.0
        %v747 = vmax.f32 %v740, 0.0
        %v748 = vmax.f32 %v743, 0.0
        %v749 = vld [vmem:[%s6] sm:$0xff]
        %v750 = vld [vmem:[%s6 + $0x8] sm:$0xff]
        %v751 = vld [vmem:[%s6 + $0x10] sm:$0xff]
        %v752 = vld [vmem:[%s6 + $0x18] sm:$0xff]
        %v753 = vld [vmem:[%s6 + $0x20] sm:$0xff]
        %v754 = vld [vmem:[%s6 + $0x28] sm:$0xff]
        %v755 = vld [vmem:[%s6 + $0x30] sm:$0xff]
        %v756 = vld [vmem:[%s6 + $0x38] sm:$0xff]
        %v757 = vld [vmem:[%s6 + $0x40] sm:$0xff]
        %v758 = vld [vmem:[%s6 + $0x48] sm:$0xff]
        %v759 = vld [vmem:[%s6 + $0x50] sm:$0xff]
        %v760 = vld [vmem:[%s6 + $0x58] sm:$0xff]
        %v761 = vld [vmem:[%s6 + $0x60] sm:$0xff]
        %v762 = vld [vmem:[%s6 + $0x68] sm:$0xff]
        %v763 = vld [vmem:[%s6 + $0x70] sm:$0xff]
        %v764 = vld [vmem:[%s6 + $0x78] sm:$0xff]
        %v765 = vld [vmem:[%s7] sm:$0x1]
        %v767 = vperm.slane %v765, 0
        %769 = vmatpush.msra.mxu0 %v764
        %770 = vmatpush.msra.mxu0 %v763
        %771 = vmatpush.msra.mxu0 %v762
        %772 = vmatpush.msra.mxu0 %v761
        %773 = vmatpush.msra.mxu0 %v760
        %774 = vmatpush.msra.mxu0 %v759
        %775 = vmatpush.msra.mxu0 %v758
        %776 = vmatpush.msra.mxu0 %v757
        %777 = vmatpush.msra.mxu0 %v756
        %778 = vmatpush.msra.mxu0 %v755
        %779 = vmatpush.msra.mxu0 %v754
        %780 = vmatpush.msra.mxu0 %v753
        %781 = vmatpush.msra.mxu0 %v752
        %782 = vmatpush.msra.mxu0 %v751
        %783 = vmatpush.msra.mxu0 %v750
        %784 = vmatpush.msra.mxu0 %v749
        %785 = vmatmul.f32.gmra.mxu0 %v745
        %v786 = vpop.f32.mrf.mxu0
        %v787 = vadd.f32 %v767, %v786
        %788 = vmatmul.f32.gmra.mxu0 %v746
        %v789 = vpop.f32.mrf.mxu0
        %v790 = vadd.f32 %v767, %v789
        %791 = vmatmul.f32.gmra.mxu0 %v747
        %v792 = vpop.f32.mrf.mxu0
        %v793 = vadd.f32 %v767, %v792
        %794 = vmatmul.f32.gmra.mxu0 %v748
        %v795 = vpop.f32.mrf.mxu0
        %v796 = vadd.f32 %v767, %v795
        %797 = vdwg.mxu0
        %v798 = vld [vmem:[%s555] sm:$0xff]
        %v799 = vld [vmem:[%s555 + $0x8] sm:$0xff]
        %v800 = vld [vmem:[%s555 + $0x10] sm:$0xff]
        %v801 = vld [vmem:[%s555 + $0x18] sm:$0xff]
        %v802 = vmul.f32 %v787, 0.5
        %v803 = vmul.f32 %v790, 0.5
        %v804 = vmul.f32 %v793, 0.5
        %v805 = vmul.f32 %v796, 0.5
        %v806 = vmul.f32 %v802, 1.442695
        %v807 = vpow.pop %v806
        %v808 = vmul.f32 %v803, 1.442695
        %v809 = vpow.pop %v808
        %v810 = vmul.f32 %v804, 1.442695
        %v811 = vpow.pop %v810
        %v812 = vmul.f32 %v805, 1.442695
        %v813 = vpow.pop %v812
        %818 = vrot.lane.b32.xlu0 %v807, 120
        %v819 = vpop.permute.xlu0 %818
        %820 = vrot.lane.b32.xlu0 %v809, 120
        %v821 = vpop.permute.xlu0 %820
        %822 = vrot.lane.b32.xlu0 %v811, 120
        %v823 = vpop.permute.xlu0 %822
        %824 = vrot.lane.b32.xlu0 %v813, 120
        %v825 = vpop.permute.xlu0 %824
        %v830 = vmul.f32 %v798, %v819
        %v831 = vmul.f32 %v799, %v821
        %v832 = vmul.f32 %v800, %v823
        %v833 = vmul.f32 %v801, %v825
        %v834 = vadd.f32 %v830, %v787
        %v835 = vadd.f32 %v831, %v790
        %v836 = vadd.f32 %v832, %v793
        %v837 = vadd.f32 %v833, %v796
        %v838 = vld [vmem:[%s8] sm:$0xff]
        %v839 = vld [vmem:[%s9] sm:$0x1]
        %v841 = vperm.slane %v839, 0
        %vm843 = vcmask 64512
        %v845 = vsel %vm843, %v834, 0
        %v848 = vsel %vm843, %v835, 0
        %v851 = vsel %vm843, %v836, 0
        %v854 = vsel %vm843, %v837, 0
        %856 = vmatpush.msra.mxu0 0.0
        %857 = vmatpush.msra.mxu0 0.0
        %858 = vmatpush.msra.mxu0 0.0
        %859 = vmatpush.msra.mxu0 0.0
        %860 = vmatpush.msra.mxu0 0.0
        %861 = vmatpush.msra.mxu0 0.0
        %862 = vmatpush.msra.mxu0 0.0
        %863 = vmatpush.msra.mxu0 0.0
        %864 = vmatpush.msra.mxu0 0.0
        %865 = vmatpush.msra.mxu0 0.0
        %866 = vmatpush.msra.mxu0 0.0
        %867 = vmatpush.msra.mxu0 0.0
        %868 = vmatpush.msra.mxu0 0.0
        %869 = vmatpush.msra.mxu0 0.0
        %870 = vmatpush.msra.mxu0 0.0
        %871 = vmatpush.msra.mxu0 %v838
        %872 = vmatmul.f32.gmra.mxu0 %v845
        %v873 = vpop.f32.mrf.mxu0
        %v874 = vadd.f32 %v841, %v873
        %875 = vmatmul.f32.gmra.mxu0 %v848
        %v876 = vpop.f32.mrf.mxu0
        %v877 = vadd.f32 %v841, %v876
        %878 = vmatmul.f32.gmra.mxu0 %v851
        %v879 = vpop.f32.mrf.mxu0
        %v880 = vadd.f32 %v841, %v879
        %881 = vmatmul.f32.gmra.mxu0 %v854
        %v882 = vpop.f32.mrf.mxu0
        %v883 = vadd.f32 %v841, %v882
        %884 = vdwg.mxu0
        %v885 = vmax.f32 %v874, 0.0
        %v886 = vmax.f32 %v877, 0.0
        %v887 = vmax.f32 %v880, 0.0
        %v888 = vmax.f32 %v883, 0.0
        %v889 = vld [vmem:[#allocation7] sm:$0xff]
        %v890 = vld [vmem:[#allocation7 + $0x8] sm:$0xff]
        %v891 = vld [vmem:[#allocation7 + $0x10] sm:$0xff]
        %v892 = vld [vmem:[#allocation7 + $0x18] sm:$0xff]
        %v893 = vld [vmem:[#allocation7 + $0x20] sm:$0xff]
        %v894 = vld [vmem:[#allocation7 + $0x28] sm:$0xff]
        %v895 = vld [vmem:[#allocation7 + $0x30] sm:$0xff]
        %v896 = vld [vmem:[#allocation7 + $0x38] sm:$0xff]
        %v897 = vld [vmem:[#allocation7 + $0x40] sm:$0xff]
        %v898 = vld [vmem:[#allocation7 + $0x48] sm:$0xff]
        %v899 = vld [vmem:[#allocation7 + $0x50] sm:$0xff]
        %v900 = vld [vmem:[#allocation7 + $0x58] sm:$0xff]
        %v901 = vld [vmem:[#allocation7 + $0x60] sm:$0xff]
        %v902 = vld [vmem:[#allocation7 + $0x68] sm:$0xff]
        %v903 = vld [vmem:[#allocation7 + $0x70] sm:$0xff]
        %v904 = vld [vmem:[#allocation7 + $0x78] sm:$0xff]
        %v905 = vld [vmem:[#allocation7 + $0x80] sm:$0xff]
        %v906 = vld [vmem:[#allocation7 + $0x88] sm:$0xff]
        %v907 = vld [vmem:[#allocation7 + $0x90] sm:$0xff]
        %v908 = vld [vmem:[#allocation7 + $0x98] sm:$0xff]
        %v909 = vld [vmem:[#allocation7 + $0xa0] sm:$0xff]
        %v910 = vld [vmem:[#allocation7 + $0xa8] sm:$0xff]
        %v911 = vld [vmem:[#allocation7 + $0xb0] sm:$0xff]
        %v912 = vld [vmem:[#allocation7 + $0xb8] sm:$0xff]
        %v913 = vld [vmem:[#allocation7 + $0xc0] sm:$0xff]
        %v914 = vld [vmem:[#allocation7 + $0xc8] sm:$0xff]
        %v915 = vld [vmem:[#allocation7 + $0xd0] sm:$0xff]
        %v916 = vld [vmem:[#allocation7 + $0xd8] sm:$0xff]
        %v917 = vld [vmem:[#allocation7 + $0xe0] sm:$0xff]
        %v918 = vld [vmem:[#allocation7 + $0xe8] sm:$0xff]
        %v919 = vld [vmem:[#allocation7 + $0xf0] sm:$0xff]
        %v920 = vld [vmem:[#allocation7 + $0xf8] sm:$0xff]
        %v921 = vld [vmem:[%s11] sm:$0x3]
        %v923 = vperm.slane %v921, 0
        %v924 = vperm.slane %v921, 1
        %927 = vmatpush.msra.mxu0 %v919
        %928 = vmatpush.msra.mxu0 %v917
        %929 = vmatpush.msra.mxu0 %v915
        %930 = vmatpush.msra.mxu0 %v913
        %931 = vmatpush.msra.mxu0 %v911
        %932 = vmatpush.msra.mxu0 %v909
        %933 = vmatpush.msra.mxu0 %v907
        %934 = vmatpush.msra.mxu0 %v905
        %935 = vmatpush.msra.mxu0 %v903
        %936 = vmatpush.msra.mxu0 %v901
        %937 = vmatpush.msra.mxu0 %v899
        %938 = vmatpush.msra.mxu0 %v897
        %939 = vmatpush.msra.mxu0 %v895
        %940 = vmatpush.msra.mxu0 %v893
        %941 = vmatpush.msra.mxu0 %v891
        %942 = vmatpush.msra.mxu0 %v889
        %943 = vmatmul.f32.gmra.mxu0 %v885
        %v944 = vpop.f32.mrf.mxu0
        %v945 = vadd.f32 %v923, %v944
        %946 = vmatmul.f32.gmra.mxu0 %v886
        %v947 = vpop.f32.mrf.mxu0
        %v948 = vadd.f32 %v923, %v947
        %949 = vmatmul.f32.gmra.mxu0 %v887
        %v950 = vpop.f32.mrf.mxu0
        %v951 = vadd.f32 %v923, %v950
        %952 = vmatmul.f32.gmra.mxu0 %v888
        %v953 = vpop.f32.mrf.mxu0
        %v954 = vadd.f32 %v923, %v953
        %955 = vdwg.mxu0
        %956 = vmatpush.msra.mxu0 %v920
        %957 = vmatpush.msra.mxu0 %v918
        %958 = vmatpush.msra.mxu0 %v916
        %959 = vmatpush.msra.mxu0 %v914
        %960 = vmatpush.msra.mxu0 %v912
        %961 = vmatpush.msra.mxu0 %v910
        %962 = vmatpush.msra.mxu0 %v908
        %963 = vmatpush.msra.mxu0 %v906
        %964 = vmatpush.msra.mxu0 %v904
        %965 = vmatpush.msra.mxu0 %v902
        %966 = vmatpush.msra.mxu0 %v900
        %967 = vmatpush.msra.mxu0 %v898
        %968 = vmatpush.msra.mxu0 %v896
        %969 = vmatpush.msra.mxu0 %v894
        %970 = vmatpush.msra.mxu0 %v892
        %971 = vmatpush.msra.mxu0 %v890
        %972 = vmatmul.f32.gmra.mxu0 %v885
        %v973 = vpop.f32.mrf.mxu0
        %v974 = vadd.f32 %v924, %v973
        %975 = vmatmul.f32.gmra.mxu0 %v886
        %v976 = vpop.f32.mrf.mxu0
        %v977 = vadd.f32 %v924, %v976
        %978 = vmatmul.f32.gmra.mxu0 %v887
        %v979 = vpop.f32.mrf.mxu0
        %v980 = vadd.f32 %v924, %v979
        %981 = vmatmul.f32.gmra.mxu0 %v888
        %v982 = vpop.f32.mrf.mxu0
        %v983 = vadd.f32 %v924, %v982
        %984 = vdwg.mxu0
        %v985 = vmax.f32 %v945, 0.0
        %v986 = vmax.f32 %v974, 0.0
        %v987 = vmax.f32 %v948, 0.0
        %v988 = vmax.f32 %v977, 0.0
        %v989 = vmax.f32 %v951, 0.0
        %v990 = vmax.f32 %v980, 0.0
        %v991 = vmax.f32 %v954, 0.0
        %v992 = vmax.f32 %v983, 0.0
        %v993 = vld [vmem:[#allocation8] sm:$0xff]
        %v994 = vld [vmem:[#allocation8 + $0x8] sm:$0xff]
        %v995 = vld [vmem:[#allocation8 + $0x10] sm:$0xff]
        %v996 = vld [vmem:[#allocation8 + $0x18] sm:$0xff]
        %v997 = vld [vmem:[#allocation8 + $0x20] sm:$0xff]
        %v998 = vld [vmem:[#allocation8 + $0x28] sm:$0xff]
        %v999 = vld [vmem:[#allocation8 + $0x30] sm:$0xff]
        %v1000 = vld [vmem:[#allocation8 + $0x38] sm:$0xff]
        %v1001 = vld [vmem:[#allocation8 + $0x40] sm:$0xff]
        %v1002 = vld [vmem:[#allocation8 + $0x48] sm:$0xff]
        %v1003 = vld [vmem:[#allocation8 + $0x50] sm:$0xff]
        %v1004 = vld [vmem:[#allocation8 + $0x58] sm:$0xff]
        %v1005 = vld [vmem:[#allocation8 + $0x60] sm:$0xff]
        %v1006 = vld [vmem:[#allocation8 + $0x68] sm:$0xff]
        %v1007 = vld [vmem:[#allocation8 + $0x70] sm:$0xff]
        %v1008 = vld [vmem:[#allocation8 + $0x78] sm:$0xff]
        %v1009 = vld [vmem:[#allocation8 + $0x80] sm:$0xff]
        %v1010 = vld [vmem:[#allocation8 + $0x88] sm:$0xff]
        %v1011 = vld [vmem:[#allocation8 + $0x90] sm:$0xff]
        %v1012 = vld [vmem:[#allocation8 + $0x98] sm:$0xff]
        %v1013 = vld [vmem:[#allocation8 + $0xa0] sm:$0xff]
        %v1014 = vld [vmem:[#allocation8 + $0xa8] sm:$0xff]
        %v1015 = vld [vmem:[#allocation8 + $0xb0] sm:$0xff]
        %v1016 = vld [vmem:[#allocation8 + $0xb8] sm:$0xff]
        %v1017 = vld [vmem:[#allocation8 + $0xc0] sm:$0xff]
        %v1018 = vld [vmem:[#allocation8 + $0xc8] sm:$0xff]
        %v1019 = vld [vmem:[#allocation8 + $0xd0] sm:$0xff]
        %v1020 = vld [vmem:[#allocation8 + $0xd8] sm:$0xff]
        %v1021 = vld [vmem:[#allocation8 + $0xe0] sm:$0xff]
        %v1022 = vld [vmem:[#allocation8 + $0xe8] sm:$0xff]
        %v1023 = vld [vmem:[#allocation8 + $0xf0] sm:$0xff]
        %v1024 = vld [vmem:[#allocation8 + $0xf8] sm:$0xff]
        %v1025 = vld [vmem:[%s13] sm:$0x1]
        %v1027 = vperm.slane %v1025, 0
        %1029 = vmatpush.msra.mxu0 %v1008
        %1030 = vmatpush.msra.mxu0 %v1007
        %1031 = vmatpush.msra.mxu0 %v1006
        %1032 = vmatpush.msra.mxu0 %v1005
        %1033 = vmatpush.msra.mxu0 %v1004
        %1034 = vmatpush.msra.mxu0 %v1003
        %1035 = vmatpush.msra.mxu0 %v1002
        %1036 = vmatpush.msra.mxu0 %v1001
        %1037 = vmatpush.msra.mxu0 %v1000
        %1038 = vmatpush.msra.mxu0 %v999
        %1039 = vmatpush.msra.mxu0 %v998
        %1040 = vmatpush.msra.mxu0 %v997
        %1041 = vmatpush.msra.mxu0 %v996
        %1042 = vmatpush.msra.mxu0 %v995
        %1043 = vmatpush.msra.mxu0 %v994
        %1044 = vmatpush.msra.mxu0 %v993
        %1045 = vmatmul.f32.gmra.mxu0 %v985
        %v1046 = vpop.f32.mrf.mxu0
        %v1047 = vadd.f32 %v1027, %v1046
        %1048 = vmatmul.f32.gmra.mxu0 %v987
        %v1049 = vpop.f32.mrf.mxu0
        %v1050 = vadd.f32 %v1027, %v1049
        %1051 = vmatmul.f32.gmra.mxu0 %v989
        %v1052 = vpop.f32.mrf.mxu0
        %v1053 = vadd.f32 %v1027, %v1052
        %1054 = vmatmul.f32.gmra.mxu0 %v991
        %v1055 = vpop.f32.mrf.mxu0
        %v1056 = vadd.f32 %v1027, %v1055
        %1057 = vdwg.mxu0
        %1058 = vmatpush.msra.mxu0 %v1024
        %1059 = vmatpush.msra.mxu0 %v1023
        %1060 = vmatpush.msra.mxu0 %v1022
        %1061 = vmatpush.msra.mxu0 %v1021
        %1062 = vmatpush.msra.mxu0 %v1020
        %1063 = vmatpush.msra.mxu0 %v1019
        %1064 = vmatpush.msra.mxu0 %v1018
        %1065 = vmatpush.msra.mxu0 %v1017
        %1066 = vmatpush.msra.mxu0 %v1016
        %1067 = vmatpush.msra.mxu0 %v1015
        %1068 = vmatpush.msra.mxu0 %v1014
        %1069 = vmatpush.msra.mxu0 %v1013
        %1070 = vmatpush.msra.mxu0 %v1012
        %1071 = vmatpush.msra.mxu0 %v1011
        %1072 = vmatpush.msra.mxu0 %v1010
        %1073 = vmatpush.msra.mxu0 %v1009
        %1074 = vmatmul.f32.gmra.mxu0 %v986
        %v1075 = vpop.f32.mrf.mxu0
        %v1076 = vadd.f32 %v1047, %v1075
        %1077 = vmatmul.f32.gmra.mxu0 %v988
        %v1078 = vpop.f32.mrf.mxu0
        %v1079 = vadd.f32 %v1050, %v1078
        %1080 = vmatmul.f32.gmra.mxu0 %v990
        %v1081 = vpop.f32.mrf.mxu0
        %v1082 = vadd.f32 %v1053, %v1081
        %1083 = vmatmul.f32.gmra.mxu0 %v992
        %v1084 = vpop.f32.mrf.mxu0
        %v1085 = vadd.f32 %v1056, %v1084
        %1086 = vdwg.mxu0
        %v1087 = vadd.f32 %v787, %v1076
        %v1088 = vadd.f32 %v790, %v1079
        %v1089 = vadd.f32 %v793, %v1082
        %v1090 = vadd.f32 %v796, %v1085
        %1091 = vst [vmem:[%s544] sm:$0xff] %v1087
        %1092 = vst [vmem:[%s544 + $0x8] sm:$0xff] %v1088
        %1093 = vst [vmem:[%s544 + $0x10] sm:$0xff] %v1089
        %1094 = vst [vmem:[%s544 + $0x18] sm:$0xff] %v1090
        %s1095 = sand.u32 %s343, 1
        %s1096 = scalar_lea.sflag [#allocation4], %s1095
        %s1097 = sand.u32 %s343, 1
        %s1098 = smul.addr %s1097, 32
        %s1099 = scalar_lea.vmem [#allocation10], %s1098
        // Predicated region
        $region93: #{tpu_custom_call.1} parent=75 // pred_check
          %p1100 = pneg %p353
        $region94: #{tpu_custom_call.1} parent=75 // pred_check_branch
          %1102 = sbr.rel (%p1100) target = $region96
        $region95: #{tpu_custom_call.1} parent=75 // pred_region
          %s1103 = smul.u32 4, %s31
          %1105 = vsyncadd %s1096, 0
          %s1106 = smul.addr %s1103, 8
          %s1107 = scalar_lea.hbm %s14, %s1106
          %s1108 = sshll.u32 %s1099, 4
          %s1109 = int_to_ptr.vmem [resolvable:$true] %s1108
          %s1110 = sshll.u32 %s1107, 4
          %s1111 = int_to_ptr.hbm [resolvable:$true] %s1110
          %1116 = dma.vmem_to_hbm [thread:$0]  %s1109, 512, %s1111, %s1096, 128, 128, 8
        $region96: #{tpu_custom_call.1} parent=75 // pred_fallthru
          _
      $region76: #{tpu_custom_call.1} parent=5 // pred_fallthru
        _
      %p1117 = scmp.le.s32.totalorder 2, %s26
      // Predicated region
      $region97: #{tpu_custom_call.1} parent=5 // pred_check
        %p1118 = pneg %p1117
      $region98: #{tpu_custom_call.1} parent=5 // pred_check_branch
        %1120 = sbr.rel (%p1118) target = $region100
      $region99: #{tpu_custom_call.1} parent=5 // pred_region
        %s1121 = ssub.s32 %s26, 2
        // Predicated region
        $region101: #{tpu_custom_call.1} parent=99 // pred_check
          %p1122 = pneg %p359
        $region102: #{tpu_custom_call.1} parent=99 // pred_check_branch
          %1124 = sbr.rel (%p1122) target = $region104
        $region103: #{tpu_custom_call.1} parent=99 // pred_region
          %s1125 = sand.u32 %s344, 1
          %s1126 = scalar_lea.sflag [#allocation4], %s1125
          %s1127 = sand.u32 %s344, 1
          %s1128 = smul.addr %s1127, 32
          %s1129 = scalar_lea.vmem [#allocation10], %s1128
          %1131 = dma.done %s1126, 512
        $region104: #{tpu_custom_call.1} parent=99 // pred_fallthru
          _
      $region100: #{tpu_custom_call.1} parent=5 // pred_fallthru
        _
    $region6: #{tpu_custom_call.1} parent=1 // loop_footer
      %s30 = sadd.s32 1, %s26
    $region7: #{tpu_custom_call.1} parent=1 // loop_footer_branch
      %25 = sbr.rel target = $region3
    $region8: #{tpu_custom_call.1} parent=1 // loop_exit
      _
    %1132 = vsyncpa [#allocation3], 1
    %s1133 = scalar_lea.sflag [#allocation3], 1
    %1134 = vsyncpa %s1133, 1
    %1135 = vsyncpa [#allocation6], 1
    %1136 = vsyncpa [#allocation9], 1
    %1137 = vsyncpa [#allocation4], 1
    %s1138 = scalar_lea.sflag [#allocation4], 1
    %1139 = vsyncpa %s1138, 1

</llo_original>
